<compile_context>
chip_gen: v5e
topology: v5e:2x2
jax: 0.10.0
libtpu: 0.0.40
codegen_flags: <defaults>
</compile_context>

<pallas_src>
import functools

import jax
import jax.numpy as jnp
from jax.experimental import pallas as pl
from jax.experimental.pallas import tpu as pltpu


def _split_heads_kernel(x_ref, o_ref, *, num_heads, head_dim):
    # x_ref: (S_TILE, H) contiguous slab for batch b (all heads).
    # o_ref: (num_heads, S_TILE, head_dim) destination block at [b, :, s_tile, :].
    # Static Python loop over heads; each slice is a static lane-range copy
    # (plain vld/vst when head_dim is a multiple of 128; hidden under DMA otherwise).
    for h in range(num_heads):
        o_ref[h, :, :] = x_ref[:, h * head_dim:(h + 1) * head_dim]


def _pick_s_tile(S, H, dtype_bytes, B, *, slab_budget_bytes=4 << 20,
                 min_total_steps=8):
    """Pick (s_tile, grid_s) for the sequence axis.

    Constraints:
      * one input slab (s_tile, H) stays under `slab_budget_bytes` (~4 MiB),
      * s_tile is a sublane multiple (or the full S) so blocks lower cleanly,
      * the grid has enough total steps (B * grid_s >= min_total_steps when S allows)
        so both v7x TensorCores get work on this bandwidth-bound copy.
    """
    sublane = max(8, 32 // dtype_bytes)  # 8 for f32, 16 for bf16, 32 for int8

    budget_rows = max(1, slab_budget_bytes // (H * dtype_bytes))
    want_s_steps = max(1, -(-min_total_steps // max(B, 1)))  # cdiv
    step_rows = max(1, S // want_s_steps)
    max_rows = max(1, min(budget_rows, step_rows))

    # Preferred: largest divisor of S that fits and is sublane-aligned (or the full S).
    best = None
    for d in range(1, S + 1):
        if S % d == 0 and d <= max_rows and (d % sublane == 0 or d == S):
            best = d
    if best is not None:
        return best, S // best

    # Fallback: sublane-aligned non-divisor tile; Pallas masks the ragged last block.
    s_tile = min(S, max(sublane, (max_rows // sublane) * sublane))
    return s_tile, -(-S // s_tile)  # cdiv


def shape_transformation(x, _unused, *, num_heads):
    """Pallas implementation of ShapeTransformation.forward(x, _).

    x: (B, S, H) with H divisible by num_heads.  Returns (B, num_heads, S, head_dim).
    The second argument is ignored, matching the PyTorch forward signature.
    """
    del _unused
    B, S, H = x.shape
    assert H % num_heads == 0, "hidden size must be divisible by num_heads"
    head_dim = H // num_heads
    dtype_bytes = jnp.dtype(x.dtype).itemsize

    s_tile, grid_s = _pick_s_tile(S, H, dtype_bytes, B)
    grid = (B, grid_s)

    # Symmetric default 2-deep buffering on input and output:
    #   live VMEM ~= 2 * slab (in) + 2 * slab (out) = 4 * s_tile * H * dtype_bytes.
    vmem_limit_bytes = 32 * 1024 * 1024
    live_bytes = 4 * s_tile * H * dtype_bytes
    assert live_bytes <= vmem_limit_bytes - (8 << 20), (
        f"tile picker exceeded VMEM budget: {live_bytes} bytes live "
        f"(s_tile={s_tile}, H={H}, dtype_bytes={dtype_bytes})")

    # Input: one contiguous (S_TILE, H) slab per step (all heads).
    in_spec = pl.BlockSpec(
        (pl.Squeezed(), s_tile, H),
        lambda b, s: (b, s, 0),
    )
    # Output: all heads of this (batch, seq-tile) at once; the last block dim equals the
    # full output extent (head_dim) and the second-to-last is a sublane multiple.
    out_spec = pl.BlockSpec(
        (pl.Squeezed(), num_heads, s_tile, head_dim),
        lambda b, s: (b, 0, s, 0),
    )

    kernel = functools.partial(
        _split_heads_kernel, num_heads=num_heads, head_dim=head_dim
    )

    bytes_accessed = 2 * B * S * H * dtype_bytes  # one full read + one full write
    return pl.pallas_call(
        kernel,
        out_shape=jax.ShapeDtypeStruct((B, num_heads, S, head_dim), x.dtype),
        grid_spec=pltpu.PrefetchScalarGridSpec(
            num_scalar_prefetch=0,
            grid=grid,
            in_specs=[in_spec],
            out_specs=out_spec,
        ),
        compiler_params=pltpu.CompilerParams(
            dimension_semantics=("parallel", "parallel"),
            vmem_limit_bytes=vmem_limit_bytes,
        ),
        cost_estimate=pl.CostEstimate(
            flops=0, transcendentals=0, bytes_accessed=bytes_accessed
        ),
    )(x)


if __name__ == "__main__":
    key = jax.random.PRNGKey(0)
    kx, ku, kx2 = jax.random.split(key, 3)

    # Case 1: head_dim = 128 (lane-dense per-head slices).
    B, S, num_heads, head_dim = 2, 16, 2, 128  # H = 256
    H = num_heads * head_dim
    x = jax.random.normal(kx, (B, S, H), dtype=jnp.float32)
    unused = jax.random.normal(ku, (B, S, H), dtype=jnp.float32)  # ignored, like `_`

    out = shape_transformation(x, unused, num_heads=num_heads)
    out = jax.block_until_ready(out)
    ref = jnp.transpose(x.reshape(B, S, num_heads, head_dim), (0, 2, 1, 3))
    assert out.shape == (B, num_heads, S, head_dim)
    assert out.dtype == x.dtype
    assert jnp.array_equal(out, ref)

    # Case 2: head_dim = 64 (< 128) — the output block's last dim equals the full output
    # extent, so it still lowers cleanly; checks the head_dim < 128 path.
    nh2, hd2 = 4, 64
    x2 = jax.random.normal(kx2, (B, S, nh2 * hd2), dtype=jnp.float32)
    out2 = jax.block_until_ready(shape_transformation(x2, unused, num_heads=nh2))
    ref2 = jnp.transpose(x2.reshape(B, S, nh2, hd2), (0, 2, 1, 3))
    assert jnp.array_equal(out2, ref2)

    print("KERNEL_OK")
</pallas_src>

<mosaic_0001>
module attributes {stable_mosaic.version = 11 : i64} {
  func.func @_split_heads_kernel(%arg0: i32, %arg1: i32, %arg2: memref<1x8x256xf32, #tpu.memory_space<vmem>>, %arg3: memref<1x2x8x128xf32, #tpu.memory_space<vmem>>) attributes {dimension_semantics = [#tpu.dimension_semantics<parallel>, #tpu.dimension_semantics<parallel>], iteration_bounds = array<i64: 2, 2>, scalar_prefetch = 0 : i64, scratch_operands = 0 : i64, tpu.core_type = #tpu.core_type<tc>, window_params = [{transform_indices = @transform_0, window_bounds = array<i64: 1, 8, 256>}, {transform_indices = @transform_1, window_bounds = array<i64: 1, 2, 8, 128>}]} {
    %c0 = arith.constant 0 : index
    %c0_0 = arith.constant 0 : index
    %c0_1 = arith.constant 0 : index
    %0 = vector.load %arg2[%c0, %c0_0, %c0_1] : memref<1x8x256xf32, #tpu.memory_space<vmem>>, vector<1x8x128xf32>
    %1 = vector.shape_cast %0 : vector<1x8x128xf32> to vector<8x128xf32>
    %c0_2 = arith.constant 0 : index
    %c0_3 = arith.constant 0 : index
    %c0_4 = arith.constant 0 : index
    %c0_5 = arith.constant 0 : index
    %2 = vector.load %arg3[%c0_2, %c0_3, %c0_4, %c0_5] : memref<1x2x8x128xf32, #tpu.memory_space<vmem>>, vector<1x1x8x128xf32>
    %3 = vector.shape_cast %2 : vector<1x1x8x128xf32> to vector<8x128xf32>
    %4 = vector.shape_cast %1 : vector<8x128xf32> to vector<1x1x8x128xf32>
    tpu.vector_store %arg3[%c0_2, %c0_3, %c0_4, %c0_5], %4 {strides = array<i32>} : memref<1x2x8x128xf32, #tpu.memory_space<vmem>>, vector<1x1x8x128xf32>,
    %c0_6 = arith.constant 0 : index
    %c0_7 = arith.constant 0 : index
    %c128 = arith.constant 128 : index
    %5 = vector.load %arg2[%c0_6, %c0_7, %c128] : memref<1x8x256xf32, #tpu.memory_space<vmem>>, vector<1x8x128xf32>
    %6 = vector.shape_cast %5 : vector<1x8x128xf32> to vector<8x128xf32>
    %c0_8 = arith.constant 0 : index
    %c1 = arith.constant 1 : index
    %c0_9 = arith.constant 0 : index
    %c0_10 = arith.constant 0 : index
    %7 = vector.load %arg3[%c0_8, %c1, %c0_9, %c0_10] : memref<1x2x8x128xf32, #tpu.memory_space<vmem>>, vector<1x1x8x128xf32>
    %8 = vector.shape_cast %7 : vector<1x1x8x128xf32> to vector<8x128xf32>
    %9 = vector.shape_cast %6 : vector<8x128xf32> to vector<1x1x8x128xf32>
    tpu.vector_store %arg3[%c0_8, %c1, %c0_9, %c0_10], %9 {strides = array<i32>} : memref<1x2x8x128xf32, #tpu.memory_space<vmem>>, vector<1x1x8x128xf32>,
    return
  }
  func.func @transform_0(%arg0: i32, %arg1: i32) -> (i32, i32, i32) {
    %c0_i32 = arith.constant 0 : i32
    %c0_i32_0 = arith.constant 0 : i32
    return %arg0, %arg1, %c0_i32 : i32, i32, i32
  }
  func.func @transform_1(%arg0: i32, %arg1: i32) -> (i32, i32, i32, i32) {
    %c0_i32 = arith.constant 0 : i32
    %c0_i32_0 = arith.constant 0 : i32
    %c0_i32_1 = arith.constant 0 : i32
    return %arg0, %c0_i32, %arg1, %c0_i32_0 : i32, i32, i32, i32
  }
}

</mosaic_0001>

<llo_original>
// kernel: tpu_custom_call.1
$region0: #{tpu_custom_call.1}
  #allocation0 [shape = 'u32[]', space=smem, size = 0x4, offset = 0x4, fixed_abs, tag = 'smem constant byte address 0x4 - core index']
  #allocation1 [shape = 'u32[72,128]{1,0:T(1,128)}', space=vmem, size = 0x9000, scoped, tag = 'internal scratch']
  %s0 = inlined_call_operand.hbm [shape: f32[2,16,256], index: 0, kind: input, shape index: {}]
  %s1 = inlined_call_operand.hbm [shape: f32[2,2,16,128], index: 1, kind: output, shape index: {}]
  %s2 = sld [smem:[#allocation0]]
  $region41: #{tpu_custom_call.1} parent=0
    _
  %s4 = ssub.s32 1, %s2
  %s5 = scalar_select 0, %s4, %s2
  $region1: #{tpu_custom_call.1} parent=0
    #allocation2 [shape = 'u8[16384]{0}', space=vmem, size = 0x4000, scoped, tag = 'input window, operand 0']
    #allocation3 [shape = 's32[2]{0}', space=sflag, size = 0x8, scoped, tag = 'scoped memory for tpu_custom_call.1']
    #allocation4 [shape = 's32[2]{0}', space=sflag, size = 0x8, scoped, tag = 'scoped memory for tpu_custom_call.1']
    #allocation5 [shape = 'u8[16384]{0}', space=vmem, size = 0x4000, scoped, tag = 'output window, operand 0']
    %6 = vsyncpa [#allocation3], 0
    %s7 = scalar_lea.sflag [#allocation3], 1
    %8 = vsyncpa %s7, 0
    %9 = vsyncpa [#allocation4], 0
    %s10 = scalar_lea.sflag [#allocation4], 1
    %11 = vsyncpa %s10, 0
    loop: start=0, step=1, limit=6
    $region2: #{tpu_custom_call.1} parent=1 // loop_pre_header
      _
    $region3: #{tpu_custom_call.1} parent=1 // loop_header
      %s13 = sphi 0, %s17
      %p14 = scmp.ge.s32.totalorder %s13, 6
      %s20 = sphi 0, %s32
      %s21 = sphi 0, %s28
      %s22 = sphi 0, %s20
      %s23 = sphi 0, %s21
      %s24 = sphi 0, %s22
      %s25 = sphi 0, %s23
      %s37 = sphi 0, %s39
      %s40 = sphi 0, %s37
      %s41 = sphi 0, %s40
      %s57 = sphi 0, %s41
      %s65 = sphi 0, %s67
      %s68 = sphi 0, %s65
      %s69 = sphi 0, %s68
      %s85 = sphi 0, %s69
    $region4: #{tpu_custom_call.1} parent=1 // loop_header_branch
      %16 = sbr.rel (%p14) target = $region8
    $region5: #{tpu_custom_call.1} parent=1 // loop_body
      %s18 = ssub.s32 %s13, 1
      %s19 = ssub.s32 %s13, 2
      %s26 = sadd.s32 1, %s21
      %p27 = scmp.ge.s32.totalorder %s26, 2
      %s28 = scalar_select %p27, 0, %s26
      %s29 = sadd.s32 1, %s20
      %s30 = scalar_select %p27, %s29, %s20
      %p31 = scmp.ge.s32.totalorder %s30, 2
      %s32 = scalar_select %p31, 0, %s30
      %s33 = ssub.s32 %s20, %s32
      %s34 = ssub.s32 %s21, %s28
      %s35 = sor.u32 %s33, %s34
      %p36 = scmp.eq.s32.totalorder %s35, 0
      %s38 = sadd.s32 %s37, 1
      %s39 = scalar_select %p36, %s37, %s38
      %p42 = pneg %p36
      %p43 = scmp.eq.s32.totalorder %s13, 3
      %p44 = por %p42, %p43
      %p45 = scmp.ne.s32.totalorder %s37, %s40
      %p46 = scmp.eq.s32.totalorder %s13, 0
      %p47 = por %p45, %p46
      %p48 = scmp.ne.s32.totalorder %s37, %s40
      %p49 = scmp.eq.s32.totalorder %s18, 3
      %p50 = por %p48, %p49
      %p51 = scmp.ne.s32.totalorder %s40, %s41
      %p52 = scmp.eq.s32.totalorder %s18, 0
      %p53 = por %p51, %p52
      %p54 = scmp.ne.s32.totalorder %s40, %s41
      %p55 = scmp.eq.s32.totalorder %s19, 3
      %p56 = por %p54, %p55
      %p58 = scmp.ne.s32.totalorder %s41, %s57
      %p59 = scmp.eq.s32.totalorder %s19, 0
      %p60 = por %p58, %p59
      %s61 = ssub.s32 %s20, %s32
      %s62 = ssub.s32 %s21, %s28
      %s63 = sor.u32 %s61, %s62
      %p64 = scmp.eq.s32.totalorder %s63, 0
      %s66 = sadd.s32 %s65, 1
      %s67 = scalar_select %p64, %s65, %s66
      %p70 = pneg %p64
      %p71 = scmp.eq.s32.totalorder %s13, 3
      %p72 = por %p70, %p71
      %p73 = scmp.ne.s32.totalorder %s65, %s68
      %p74 = scmp.eq.s32.totalorder %s13, 0
      %p75 = por %p73, %p74
      %p76 = scmp.ne.s32.totalorder %s65, %s68
      %p77 = scmp.eq.s32.totalorder %s18, 3
      %p78 = por %p76, %p77
      %p79 = scmp.ne.s32.totalorder %s68, %s69
      %p80 = scmp.eq.s32.totalorder %s18, 0
      %p81 = por %p79, %p80
      %p82 = scmp.ne.s32.totalorder %s68, %s69
      %p83 = scmp.eq.s32.totalorder %s19, 3
      %p84 = por %p82, %p83
      %p86 = scmp.ne.s32.totalorder %s69, %s85
      %p87 = scmp.eq.s32.totalorder %s19, 0
      %p88 = por %p86, %p87
      %p89 = scmp.le.s32.totalorder 1, %s13
      %p90 = scmp.lt.s32.totalorder %s13, 5
      %p91 = pnand %p89, %p90
      %p92 = pneg %p91
      // Predicated region
      $region9: #{tpu_custom_call.1} parent=5 // pred_check
        _
      $region10: #{tpu_custom_call.1} parent=5 // pred_check_branch
        %94 = sbr.rel (%p91) target = $region12
      $region11: #{tpu_custom_call.1} parent=5 // pred_region
        %s95 = ssub.s32 %s13, 1
      $region12: #{tpu_custom_call.1} parent=5 // pred_fallthru
        _
      %p96 = scmp.lt.s32.totalorder %s13, 4
      // Predicated region
      $region13: #{tpu_custom_call.1} parent=5 // pred_check
        %p97 = pneg %p96
      $region14: #{tpu_custom_call.1} parent=5 // pred_check_branch
        %99 = sbr.rel (%p97) target = $region16
      $region15: #{tpu_custom_call.1} parent=5 // pred_region
        // Predicated region
        $region17: #{tpu_custom_call.1} parent=15 // pred_check
          %p100 = pneg %p47
        $region18: #{tpu_custom_call.1} parent=15 // pred_check_branch
          %102 = sbr.rel (%p100) target = $region20
        $region19: #{tpu_custom_call.1} parent=15 // pred_region
          %s103 = sand.u32 %s37, 1
          %s104 = scalar_lea.sflag [#allocation3], %s103
          %s105 = sand.u32 %s37, 1
          %s106 = smul.addr %s105, 16
          %s107 = scalar_lea.vmem [#allocation2], %s106
          %109 = vsyncadd %s104, 0
          %s110 = smul.addr %s21, 2
          %s111 = smul.addr %s20, 4
          %s112 = sadd.s32 %s110, %s111
          %s113 = smul.addr %s112, 8
          %s114 = scalar_lea.hbm %s0, %s113
          %s116 = sshll.u32 %s114, 4
          %s117 = int_to_ptr.hbm [resolvable:$true] %s116
          %s118 = sshll.u32 %s107, 4
          %s119 = int_to_ptr.vmem [resolvable:$true] %s118
          %121 = dma.hbm_to_vmem [thread:$0]  %s117, 256, %s119, %s104
        $region20: #{tpu_custom_call.1} parent=15 // pred_fallthru
          _
      $region16: #{tpu_custom_call.1} parent=5 // pred_fallthru
        _
      %p122 = scmp.le.s32.totalorder 1, %s13
      %p123 = scmp.lt.s32.totalorder %s13, 5
      %p124 = pnand %p122, %p123
      %p125 = pneg %p124
      // Predicated region
      $region21: #{tpu_custom_call.1} parent=5 // pred_check
        _
      $region22: #{tpu_custom_call.1} parent=5 // pred_check_branch
        %127 = sbr.rel (%p124) target = $region24
      $region23: #{tpu_custom_call.1} parent=5 // pred_region
        %s128 = ssub.s32 %s13, 1
        %s129 = sand.u32 %s40, 1
        %s130 = scalar_lea.sflag [#allocation3], %s129
        %s131 = sand.u32 %s40, 1
        %s132 = smul.addr %s131, 16
        %s133 = scalar_lea.vmem [#allocation2], %s132
        // Predicated region
        $region25: #{tpu_custom_call.1} parent=23 // pred_check
          %p134 = pneg %p53
        $region26: #{tpu_custom_call.1} parent=23 // pred_check_branch
          %136 = sbr.rel (%p134) target = $region28
        $region27: #{tpu_custom_call.1} parent=23 // pred_region
          %138 = dma.done %s130, 256
        $region28: #{tpu_custom_call.1} parent=23 // pred_fallthru
          _
        %s139 = sand.u32 %s40, 1
        %s140 = scalar_lea.sflag [#allocation3], %s139
        %s141 = sand.u32 %s40, 1
        %s142 = smul.addr %s141, 16
        %s143 = scalar_lea.vmem [#allocation2], %s142
        %p144 = pneg %p53
        %p145 = pneg %p50
        %p146 = pneg %p81
        %p147 = pneg %p78
        %s148 = sand.u32 %s68, 1
        %s149 = scalar_lea.sflag [#allocation4], %s148
        %s150 = sand.u32 %s68, 1
        %s151 = smul.addr %s150, 16
        %s152 = scalar_lea.vmem [#allocation5], %s151
        %v153 = vld [vmem:[%s133] sm:$0xff]
        %154 = vst [vmem:[%s152] sm:$0xff] %v153
        %v155 = vld [vmem:[%s133 + $0x8] sm:$0xff]
        %s156 = scalar_lea.vmem %s152, 8 [#allocation5]
        %157 = vst [vmem:[%s156] sm:$0xff] %v155
        %s158 = sand.u32 %s68, 1
        %s159 = scalar_lea.sflag [#allocation4], %s158
        %s160 = sand.u32 %s68, 1
        %s161 = smul.addr %s160, 16
        %s162 = scalar_lea.vmem [#allocation5], %s161
        // Predicated region
        $region29: #{tpu_custom_call.1} parent=23 // pred_check
          %p163 = pneg %p78
        $region30: #{tpu_custom_call.1} parent=23 // pred_check_branch
          %165 = sbr.rel (%p163) target = $region32
        $region31: #{tpu_custom_call.1} parent=23 // pred_region
          %167 = vsyncadd %s159, 0
          %s168 = smul.addr %s22, 4
          %s169 = sadd.s32 %s23, %s168
          %s170 = smul.addr %s169, 8
          %s171 = scalar_lea.hbm %s1, %s170
          %s172 = sshll.u32 %s162, 4
          %s173 = int_to_ptr.vmem [resolvable:$true] %s172
          %s174 = sshll.u32 %s171, 4
          %s175 = int_to_ptr.hbm [resolvable:$true] %s174
          %180 = dma.vmem_to_hbm [thread:$0]  %s173, 256, %s175, %s159, 128, 256, 8
        $region32: #{tpu_custom_call.1} parent=23 // pred_fallthru
          _
      $region24: #{tpu_custom_call.1} parent=5 // pred_fallthru
        _
      %p181 = scmp.le.s32.totalorder 2, %s13
      // Predicated region
      $region33: #{tpu_custom_call.1} parent=5 // pred_check
        %p182 = pneg %p181
      $region34: #{tpu_custom_call.1} parent=5 // pred_check_branch
        %184 = sbr.rel (%p182) target = $region36
      $region35: #{tpu_custom_call.1} parent=5 // pred_region
        %s185 = ssub.s32 %s13, 2
        // Predicated region
        $region37: #{tpu_custom_call.1} parent=35 // pred_check
          %p186 = pneg %p84
        $region38: #{tpu_custom_call.1} parent=35 // pred_check_branch
          %188 = sbr.rel (%p186) target = $region40
        $region39: #{tpu_custom_call.1} parent=35 // pred_region
          %s189 = sand.u32 %s69, 1
          %s190 = scalar_lea.sflag [#allocation4], %s189
          %s191 = sand.u32 %s69, 1
          %s192 = smul.addr %s191, 16
          %s193 = scalar_lea.vmem [#allocation5], %s192
          %195 = dma.done %s190, 256
        $region40: #{tpu_custom_call.1} parent=35 // pred_fallthru
          _
      $region36: #{tpu_custom_call.1} parent=5 // pred_fallthru
        _
    $region6: #{tpu_custom_call.1} parent=1 // loop_footer
      %s17 = sadd.s32 1, %s13
    $region7: #{tpu_custom_call.1} parent=1 // loop_footer_branch
      %12 = sbr.rel target = $region3
    $region8: #{tpu_custom_call.1} parent=1 // loop_exit
      _
    %196 = vsyncpa [#allocation3], 1
    %s197 = scalar_lea.sflag [#allocation3], 1
    %198 = vsyncpa %s197, 1
    %199 = vsyncpa [#allocation4], 1
    %s200 = scalar_lea.sflag [#allocation4], 1
    %201 = vsyncpa %s200, 1

</llo_original>
